<compile_context>
chip_gen: v7x
topology: tpu7x:2x2x1
jax: 0.10.0
libtpu: 0.0.40
codegen_flags: <defaults>
</compile_context>

<pallas_src>
import functools

import jax
import jax.numpy as jnp
from jax.experimental import pallas as pl
from jax.experimental.pallas import tpu as pltpu


def _round_up(a, m):
    return ((a + m - 1) // m) * m


def _output_process_kernel(x_ref, w1_ref, b1_ref, w2_ref, b2_ref, o_ref, *,
                           inv_d):
    # Cast x to the MXU input dtype in-kernel (hidden under the matmul).
    x = x_ref[...].astype(w1_ref.dtype)

    # dense: h = x @ W1^T + b1   (W1 pre-transposed to (D, D) in the wrapper)
    h = jnp.dot(x, w1_ref[...], preferred_element_type=jnp.float32)
    h = h + b1_ref[...]

    # exact GELU (matches F.gelu default): 0.5 * x * (1 + erf(x / sqrt(2)))
    # TODO(synk): benchmark jax.nn.gelu(approximate=True) (tanh -> EUP slot)
    # if downstream tolerates approximate-GELU numerics.
    h = 0.5 * h * (1.0 + jax.lax.erf(h * jnp.float32(0.7071067811865476)))

    # One-pass LayerNorm statistics over the TRUE latent dim (padded columns
    # of h are exactly zero, so the sums are unaffected).
    s1 = jnp.sum(h, axis=-1, keepdims=True)
    s2 = jnp.sum(h * h, axis=-1, keepdims=True)
    mean = s1 * inv_d
    var = jnp.maximum(s2 * inv_d - mean * mean, 0.0)
    h = (h - mean) * jax.lax.rsqrt(var + jnp.float32(1e-12))
    # (gamma / beta are folded into W2 / b2 by the wrapper.)

    # poseFinal: out = h_n @ (gamma[:,None] * W2^T) + (beta @ W2^T + b2)
    out = jnp.dot(h.astype(w2_ref.dtype), w2_ref[...],
                  preferred_element_type=jnp.float32)
    o_ref[...] = (out + b2_ref[...]).astype(o_ref.dtype)


@functools.partial(jax.jit, static_argnames=("tm",))
def output_process_bert(hidden_states, params, *, tm=512):
    """hidden_states: (T, B, D) -> output: (B, out_feats, T).

    tm: target row-tile size. 512 is a safe cross-generation default
    (v7x has 64 MiB VMEM/TC); on v6e with large T*B, tm=1024 halves the
    per-step overhead now that the constants are single-buffered.
    """
    T, B, D = hidden_states.shape
    w1, b1, gamma, beta, w2, b2 = (
        params["dense_w"], params["dense_b"],
        params["ln_g"], params["ln_b"],
        params["pose_w"], params["pose_b"],
    )
    F_out = w2.shape[0]
    rows = T * B

    compute_dtype = jnp.bfloat16        # MXU inputs; accumulation stays f32.

    # ---- row tile ---------------------------------------------------------
    tm = max(16, (int(tm) // 16) * 16)            # sublane-friendly tile
    # Prefer >= 2 grid steps so the "parallel" axis spans both v7x cores.
    half = _round_up(-(-rows // 2), 16)
    TM = min(tm, half)
    if TM >= rows:
        TM = rows                                 # single full block (legal)
    grid_m = -(-rows // TM)                       # partial last block is OK

    # ---- contraction / LN dim: lane-pad only if needed ---------------------
    D_pad = _round_up(D, 128)

    x2d = hidden_states.reshape(rows, D)
    if D_pad != D:
        x2d = jnp.pad(x2d, ((0, 0), (0, D_pad - D)))

    # PyTorch (out, in) weights -> (in, out); fold the LN affine into
    # poseFinal:  (h_n*gamma + beta) @ W2^T + b2
    #           == h_n @ (gamma[:,None]*W2^T) + (beta @ W2^T + b2)
    w1_t = w1.T.astype(compute_dtype)                              # (D, D)
    b1_r = b1.reshape(1, D).astype(jnp.float32)
    w2_t = (gamma[:, None] * w2.T).astype(compute_dtype)           # (D, F)
    b2_r = (b2 + beta @ w2.T).reshape(1, F_out).astype(jnp.float32)
    if D_pad != D:
        w1_t = jnp.pad(w1_t, ((0, D_pad - D), (0, D_pad - D)))
        b1_r = jnp.pad(b1_r, ((0, 0), (0, D_pad - D)))
        w2_t = jnp.pad(w2_t, ((0, D_pad - D), (0, 0)))

    # ---- VMEM budget (x double-buffered, constants single-buffered) --------
    x_bytes = jnp.dtype(hidden_states.dtype).itemsize
    vmem_est = (2 * TM * D_pad * x_bytes          # x tiles (double-buffered)
                + 2 * TM * F_out * 4              # out tiles (double-buffered)
                + D_pad * D_pad * 2               # W1^T (single-buffered)
                + D_pad * F_out * 2               # W2^T (single-buffered)
                + 6 * TM * D_pad * 4)             # f32 intermediates headroom
    vmem_limit = int(min(64 * 1024 * 1024,
                         max(32 * 1024 * 1024, vmem_est)))

    # Constants: resident across the grid, single-buffered.
    const = lambda shape: pl.BlockSpec(shape, lambda i: (0, 0),
                                       pipeline_mode=pl.Buffered(1))

    kernel = functools.partial(_output_process_kernel, inv_d=float(1.0 / D))

    out2d = pl.pallas_call(
        kernel,
        out_shape=jax.ShapeDtypeStruct((rows, F_out), jnp.float32),
        grid_spec=pltpu.PrefetchScalarGridSpec(
            num_scalar_prefetch=0,
            grid=(grid_m,),
            in_specs=[
                pl.BlockSpec((TM, D_pad), lambda i: (i, 0)),   # x row tile
                const((D_pad, D_pad)),     # W1^T
                const((1, D_pad)),         # b1
                const((D_pad, F_out)),     # gamma-folded W2^T
                const((1, F_out)),         # beta-folded b2
            ],
            out_specs=pl.BlockSpec((TM, F_out), lambda i: (i, 0)),
        ),
        compiler_params=pltpu.CompilerParams(
            dimension_semantics=("parallel",),
            vmem_limit_bytes=vmem_limit),
    )(x2d, w1_t, b1_r, w2_t, b2_r)

    # TODO(synk): emit the (B, F, T) layout directly from the kernel (in-tile
    # XLU transpose + 3-D out BlockSpec) to drop this XLA transpose pass.
    out = out2d.reshape(T, B, F_out)                 # (T, B, F)
    return jnp.transpose(out, (1, 2, 0)).astype(hidden_states.dtype)


def init_params(key, out_feats, latent_dim):
    k1, k2, k3, k4, k5, k6 = jax.random.split(key, 6)
    # Deterministic, roughly PyTorch-Linear-scaled init.
    s1 = 1.0 / jnp.sqrt(latent_dim)
    return {
        "dense_w": jax.random.uniform(k1, (latent_dim, latent_dim),
                                      jnp.float32, -s1, s1),
        "dense_b": jax.random.uniform(k2, (latent_dim,), jnp.float32, -s1, s1),
        # Non-default LN affine so the gamma/beta-folding path is exercised.
        "ln_g": 1.0 + 0.1 * jax.random.normal(k5, (latent_dim,), jnp.float32),
        "ln_b": 0.1 * jax.random.normal(k6, (latent_dim,), jnp.float32),
        "pose_w": jax.random.uniform(k3, (out_feats, latent_dim),
                                     jnp.float32, -s1, s1),
        "pose_b": jax.random.uniform(k4, (out_feats,), jnp.float32, -s1, s1),
    }


if __name__ == "__main__":
    key = jax.random.PRNGKey(0)
    kx, kp = jax.random.split(key)

    T, B, latent_dim, out_feats = 8, 2, 32, 16
    hidden_states = jax.random.normal(kx, (T, B, latent_dim), jnp.float32)
    params = init_params(kp, out_feats, latent_dim)

    out = jax.block_until_ready(output_process_bert(hidden_states, params))

    # Pure-f32 reference (kernel feeds the MXU bf16 inputs, so tolerance is
    # relaxed; GELU / LN / bias / accumulation math is f32 in the kernel).
    def ref(x, p):
        h = x @ p["dense_w"].T + p["dense_b"]
        h = 0.5 * h * (1.0 + jax.lax.erf(h / jnp.sqrt(2.0)))
        mu = jnp.mean(h, axis=-1, keepdims=True)
        var = jnp.mean((h - mu) ** 2, axis=-1, keepdims=True)
        h = (h - mu) / jnp.sqrt(var + 1e-12) * p["ln_g"] + p["ln_b"]
        o = h @ p["pose_w"].T + p["pose_b"]
        return jnp.transpose(o, (1, 2, 0))

    expected = ref(hidden_states, params)
    assert out.shape == (B, out_feats, T), out.shape
    max_err = float(jnp.max(jnp.abs(out - expected)))
    assert jnp.allclose(out, expected, atol=5e-2, rtol=5e-2), max_err
    print("KERNEL_OK")
</pallas_src>

<mosaic_0001>
module attributes {stable_mosaic.version = 11 : i64} {
  func.func @_output_process_kernel(%arg0: i32, %arg1: memref<16x128xf32, #tpu.memory_space<vmem>>, %arg2: memref<128x128xbf16, #tpu.memory_space<vmem>>, %arg3: memref<1x128xf32, #tpu.memory_space<vmem>>, %arg4: memref<128x16xbf16, #tpu.memory_space<vmem>>, %arg5: memref<1x16xf32, #tpu.memory_space<vmem>>, %arg6: memref<16x16xf32, #tpu.memory_space<vmem>>) attributes {dimension_semantics = [#tpu.dimension_semantics<parallel>], iteration_bounds = array<i64: 1>, scalar_prefetch = 0 : i64, scratch_operands = 0 : i64, tpu.core_type = #tpu.core_type<tc>, window_params = [{transform_indices = @transform_0, window_bounds = array<i64: 16, 128>}, {pipeline_mode = #tpu.pipeline_mode<synchronous>, transform_indices = @transform_1, window_bounds = array<i64: 128, 128>}, {pipeline_mode = #tpu.pipeline_mode<synchronous>, transform_indices = @transform_2, window_bounds = array<i64: 1, 128>}, {pipeline_mode = #tpu.pipeline_mode<synchronous>, transform_indices = @transform_3, window_bounds = array<i64: 128, 16>}, {pipeline_mode = #tpu.pipeline_mode<synchronous>, transform_indices = @transform_4, window_bounds = array<i64: 1, 16>}, {transform_indices = @transform_5, window_bounds = array<i64: 16, 16>}]} {
    %c0 = arith.constant 0 : index
    %c0_0 = arith.constant 0 : index
    %0 = vector.load %arg1[%c0, %c0_0] : memref<16x128xf32, #tpu.memory_space<vmem>>, vector<16x128xf32>
    %1 = arith.truncf %0 : vector<16x128xf32> to vector<16x128xbf16>
    %c0_1 = arith.constant 0 : index
    %c0_2 = arith.constant 0 : index
    %2 = vector.load %arg2[%c0_1, %c0_2] : memref<128x128xbf16, #tpu.memory_space<vmem>>, vector<128x128xbf16>
    %cst = arith.constant dense<0.000000e+00> : vector<16x128xf32>
    %3 = tpu.matmul %1, %2, %cst {dimension_numbers = #tpu.dot_dimension_numbers<[1], [0], [0], [1], [0, 0, 1, 1], [], []>} : vector<16x128xbf16>, vector<128x128xbf16>, vector<16x128xf32> -> vector<16x128xf32>
    %c0_3 = arith.constant 0 : index
    %c0_4 = arith.constant 0 : index
    %4 = vector.load %arg3[%c0_3, %c0_4] : memref<1x128xf32, #tpu.memory_space<vmem>>, vector<1x128xf32>
    %5 = vector.broadcast %4 : vector<1x128xf32> to vector<16x128xf32>
    %6 = arith.addf %3, %5 : vector<16x128xf32>
    %cst_5 = arith.constant 5.000000e-01 : f32
    %7 = vector.broadcast %cst_5 : f32 to vector<16x128xf32>
    %8 = arith.mulf %7, %6 : vector<16x128xf32>
    %cst_6 = arith.constant 0.707106769 : f32
    %9 = vector.broadcast %cst_6 : f32 to vector<16x128xf32>
    %10 = arith.mulf %6, %9 : vector<16x128xf32>
    %11 = math.erf %10 : vector<16x128xf32>
    %cst_7 = arith.constant 1.000000e+00 : f32
    %12 = vector.broadcast %cst_7 : f32 to vector<16x128xf32>
    %13 = arith.addf %12, %11 : vector<16x128xf32>
    %14 = arith.mulf %8, %13 : vector<16x128xf32>
    %cst_8 = arith.constant dense<0.000000e+00> : vector<16xf32>
    %15 = vector.multi_reduction <add>, %14, %cst_8 [1] : vector<16x128xf32> to vector<16xf32>
    %16 = vector.shape_cast %15 : vector<16xf32> to vector<16x1xf32>
    %17 = arith.mulf %14, %14 : vector<16x128xf32>
    %cst_9 = arith.constant dense<0.000000e+00> : vector<16xf32>
    %18 = vector.multi_reduction <add>, %17, %cst_9 [1] : vector<16x128xf32> to vector<16xf32>
    %19 = vector.shape_cast %18 : vector<16xf32> to vector<16x1xf32>
    %cst_10 = arith.constant 3.125000e-02 : f32
    %20 = vector.broadcast %cst_10 : f32 to vector<16x1xf32>
    %21 = arith.mulf %16, %20 : vector<16x1xf32>
    %cst_11 = arith.constant 3.125000e-02 : f32
    %22 = vector.broadcast %cst_11 : f32 to vector<16x1xf32>
    %23 = arith.mulf %19, %22 : vector<16x1xf32>
    %24 = arith.mulf %21, %21 : vector<16x1xf32>
    %25 = arith.subf %23, %24 : vector<16x1xf32>
    %cst_12 = arith.constant 0.000000e+00 : f32
    %26 = vector.broadcast %cst_12 : f32 to vector<16x1xf32>
    %27 = arith.maximumf %25, %26 : vector<16x1xf32>
    %28 = vector.broadcast %21 : vector<16x1xf32> to vector<16x128xf32>
    %29 = arith.subf %14, %28 : vector<16x128xf32>
    %cst_13 = arith.constant 9.99999996E-13 : f32
    %30 = vector.broadcast %cst_13 : f32 to vector<16x1xf32>
    %31 = arith.addf %27, %30 : vector<16x1xf32>
    %32 = math.rsqrt %31 : vector<16x1xf32>
    %33 = vector.broadcast %32 : vector<16x1xf32> to vector<16x128xf32>
    %34 = arith.mulf %29, %33 : vector<16x128xf32>
    %35 = arith.truncf %34 : vector<16x128xf32> to vector<16x128xbf16>
    %c0_14 = arith.constant 0 : index
    %c0_15 = arith.constant 0 : index
    %36 = vector.load %arg4[%c0_14, %c0_15] : memref<128x16xbf16, #tpu.memory_space<vmem>>, vector<128x16xbf16>
    %cst_16 = arith.constant dense<0.000000e+00> : vector<16x16xf32>
    %37 = tpu.matmul %35, %36, %cst_16 {dimension_numbers = #tpu.dot_dimension_numbers<[1], [0], [0], [1], [0, 0, 1, 1], [], []>} : vector<16x128xbf16>, vector<128x16xbf16>, vector<16x16xf32> -> vector<16x16xf32>
    %c0_17 = arith.constant 0 : index
    %c0_18 = arith.constant 0 : index
    %38 = vector.load %arg5[%c0_17, %c0_18] : memref<1x16xf32, #tpu.memory_space<vmem>>, vector<1x16xf32>
    %39 = vector.broadcast %38 : vector<1x16xf32> to vector<16x16xf32>
    %40 = arith.addf %37, %39 : vector<16x16xf32>
    %c0_19 = arith.constant 0 : index
    %c0_20 = arith.constant 0 : index
    %41 = vector.load %arg6[%c0_19, %c0_20] : memref<16x16xf32, #tpu.memory_space<vmem>>, vector<16x16xf32>
    tpu.vector_store %arg6[%c0_19, %c0_20], %40 {strides = array<i32>} : memref<16x16xf32, #tpu.memory_space<vmem>>, vector<16x16xf32>,
    return
  }
  func.func @transform_0(%arg0: i32) -> (i32, i32) {
    %c0_i32 = arith.constant 0 : i32
    %c0_i32_0 = arith.constant 0 : i32
    return %arg0, %c0_i32 : i32, i32
  }
  func.func @transform_1(%arg0: i32) -> (i32, i32) {
    %c0_i32 = arith.constant 0 : i32
    %c0_i32_0 = arith.constant 0 : i32
    %c0_i32_1 = arith.constant 0 : i32
    return %c0_i32, %c0_i32_0 : i32, i32
  }
  func.func @transform_2(%arg0: i32) -> (i32, i32) {
    %c0_i32 = arith.constant 0 : i32
    %c0_i32_0 = arith.constant 0 : i32
    %c0_i32_1 = arith.constant 0 : i32
    return %c0_i32, %c0_i32_0 : i32, i32
  }
  func.func @transform_3(%arg0: i32) -> (i32, i32) {
    %c0_i32 = arith.constant 0 : i32
    %c0_i32_0 = arith.constant 0 : i32
    %c0_i32_1 = arith.constant 0 : i32
    return %c0_i32, %c0_i32_0 : i32, i32
  }
  func.func @transform_4(%arg0: i32) -> (i32, i32) {
    %c0_i32 = arith.constant 0 : i32
    %c0_i32_0 = arith.constant 0 : i32
    %c0_i32_1 = arith.constant 0 : i32
    return %c0_i32, %c0_i32_0 : i32, i32
  }
  func.func @transform_5(%arg0: i32) -> (i32, i32) {
    %c0_i32 = arith.constant 0 : i32
    %c0_i32_0 = arith.constant 0 : i32
    return %arg0, %c0_i32 : i32, i32
  }
}

</mosaic_0001>

<llo_original>
// kernel: output_process_bert.1
$region0: #{output_process_bert.1}
  #allocation0 [shape = 'u32[]', space=smem, size = 0x4, offset = 0x4, fixed_abs, tag = 'smem constant byte address 0x4 - core index']
  #allocation1 [shape = 'u32[144,128]{1,0:T(1,128)}', space=vmem, size = 0x12000, scoped, tag = 'internal scratch']
  %s0 = inlined_call_operand.vmem [shape: f32[16,128], index: 0, kind: input, shape index: {}]
  %s1 = inlined_call_operand.vmem [shape: bf16[128,128], index: 1, kind: input, shape index: {}]
  %s2 = inlined_call_operand.vmem [shape: f32[1,128], index: 2, kind: input, shape index: {}]
  %s3 = inlined_call_operand.vmem [shape: bf16[128,16], index: 3, kind: input, shape index: {}]
  %s4 = inlined_call_operand.vmem [shape: f32[1,16], index: 4, kind: input, shape index: {}]
  %s5 = inlined_call_operand.vmem [shape: f32[16,16], index: 5, kind: output, shape index: {}]
  %s6 = sld [smem:[#allocation0]]
  $region30: #{output_process_bert.1} parent=0
    _
  %s8 = ssub.s32 1, %s6
  %s9 = scalar_select 0, %s8, %s6
  // Predicated region
  $region2: #{output_process_bert.1} parent=0 // pred_check
    _
  $region3: #{output_process_bert.1} parent=0 // pred_check_branch
    %11 = sbr.rel (0) target = $region5
  $region4: #{output_process_bert.1} parent=0 // pred_region
    _
  $region5: #{output_process_bert.1} parent=0 // pred_fallthru
    _
  // Predicated region
  $region6: #{output_process_bert.1} parent=0 // pred_check
    _
  $region7: #{output_process_bert.1} parent=0 // pred_check_branch
    %13 = sbr.rel (0) target = $region9
  $region8: #{output_process_bert.1} parent=0 // pred_region
    _
  $region9: #{output_process_bert.1} parent=0 // pred_fallthru
    _
  // Predicated region
  $region10: #{output_process_bert.1} parent=0 // pred_check
    _
  $region11: #{output_process_bert.1} parent=0 // pred_check_branch
    %15 = sbr.rel (0) target = $region13
  $region12: #{output_process_bert.1} parent=0 // pred_region
    _
  $region13: #{output_process_bert.1} parent=0 // pred_fallthru
    _
  // Predicated region
  $region14: #{output_process_bert.1} parent=0 // pred_check
    _
  $region15: #{output_process_bert.1} parent=0 // pred_check_branch
    %17 = sbr.rel (0) target = $region17
  $region16: #{output_process_bert.1} parent=0 // pred_region
    _
  $region17: #{output_process_bert.1} parent=0 // pred_fallthru
    _
  // Predicated region
  $region18: #{output_process_bert.1} parent=0 // pred_check
    _
  $region19: #{output_process_bert.1} parent=0 // pred_check_branch
    %19 = sbr.rel (0) target = $region21
  $region20: #{output_process_bert.1} parent=0 // pred_region
    _
  $region21: #{output_process_bert.1} parent=0 // pred_fallthru
    _
  %v21 = vld [vmem:[%s0] sm:$0xff]
  %v22 = vld [vmem:[%s0 + $0x8] sm:$0xff]
  %v23 = vpack.c.bf16 %v22, %v21
  %v24 = vld [vmem:[%s1] sm:$0xf]
  %v25 = vld [vmem:[%s1 + $0x4] sm:$0xf]
  %v26 = vld [vmem:[%s1 + $0x8] sm:$0xf]
  %v27 = vld [vmem:[%s1 + $0xc] sm:$0xf]
  %v28 = vld [vmem:[%s1 + $0x10] sm:$0xf]
  %v29 = vld [vmem:[%s1 + $0x14] sm:$0xf]
  %v30 = vld [vmem:[%s1 + $0x18] sm:$0xf]
  %v31 = vld [vmem:[%s1 + $0x1c] sm:$0xf]
  %v32 = vld [vmem:[%s1 + $0x20] sm:$0xf]
  %v33 = vld [vmem:[%s1 + $0x24] sm:$0xf]
  %v34 = vld [vmem:[%s1 + $0x28] sm:$0xf]
  %v35 = vld [vmem:[%s1 + $0x2c] sm:$0xf]
  %v36 = vld [vmem:[%s1 + $0x30] sm:$0xf]
  %v37 = vld [vmem:[%s1 + $0x34] sm:$0xf]
  %v38 = vld [vmem:[%s1 + $0x38] sm:$0xf]
  %v39 = vld [vmem:[%s1 + $0x3c] sm:$0xf]
  %v40 = vld [vmem:[%s2] sm:$0x1]
  %v42 = vlaneseq
  %v43 = vshrl.u32 %v42, 7
  %v44 = vsub.s32 0, %v43
  %v45 = vrot.slane %v40, %v44
  %v63 = vunpack.c.l.b16 %v24
  %v64 = vunpack.c.l.b16 %v25
  %v65 = vunpack.c.l.b16 %v26
  %v66 = vunpack.c.l.b16 %v27
  %v67 = vunpack.c.l.b16 %v28
  %v68 = vunpack.c.l.b16 %v29
  %v69 = vunpack.c.l.b16 %v30
  %v70 = vunpack.c.l.b16 %v31
  %v71 = vunpack.c.l.b16 %v32
  %v72 = vunpack.c.l.b16 %v33
  %v73 = vunpack.c.l.b16 %v34
  %v74 = vunpack.c.l.b16 %v35
  %v75 = vunpack.c.l.b16 %v36
  %v76 = vunpack.c.l.b16 %v37
  %v77 = vunpack.c.l.b16 %v38
  %v78 = vunpack.c.l.b16 %v39
  %v79 = vpack.c.b16 %v64, %v63
  %v80 = vpack.c.b16 %v66, %v65
  %v81 = vpack.c.b16 %v68, %v67
  %v82 = vpack.c.b16 %v70, %v69
  %v83 = vpack.c.b16 %v72, %v71
  %v84 = vpack.c.b16 %v74, %v73
  %v85 = vpack.c.b16 %v76, %v75
  %v86 = vpack.c.b16 %v78, %v77
  %95 = vmatprep.subr.bf16.mxu0 0
  %96 = vmatpush1.bf16.msra.mxu0 %v79
  %97 = vmatprep.subr.bf16.mxu0 0
  %98 = vmatpush1.bf16.msra.mxu0 %v80
  %99 = vmatprep.subr.bf16.mxu0 0
  %100 = vmatpush1.bf16.msra.mxu0 %v81
  %101 = vmatprep.subr.bf16.mxu0 0
  %102 = vmatpush1.bf16.msra.mxu0 %v82
  %103 = vmatprep.subr.bf16.mxu0 0
  %104 = vmatpush1.bf16.msra.mxu0 %v83
  %105 = vmatprep.subr.bf16.mxu0 0
  %106 = vmatpush1.bf16.msra.mxu0 %v84
  %107 = vmatprep.subr.bf16.mxu0 0
  %108 = vmatpush1.bf16.msra.mxu0 %v85
  %109 = vmatprep.subr.bf16.mxu0 0
  %110 = vmatpush1.bf16.msra.mxu0 %v86
  %111 = vmatprep.subr.bf16.mxu0 0
  %112 = vmatpush1.bf16.msra.mxu0 0
  %113 = vmatprep.subr.bf16.mxu0 0
  %114 = vmatpush1.bf16.msra.mxu0 0
  %115 = vmatprep.subr.bf16.mxu0 0
  %116 = vmatpush1.bf16.msra.mxu0 0
  %117 = vmatprep.subr.bf16.mxu0 0
  %118 = vmatpush1.bf16.msra.mxu0 0
  %119 = vmatprep.subr.bf16.mxu0 0
  %120 = vmatpush1.bf16.msra.mxu0 0
  %121 = vmatprep.subr.bf16.mxu0 0
  %122 = vmatpush1.bf16.msra.mxu0 0
  %123 = vmatprep.subr.bf16.mxu0 0
  %124 = vmatpush1.bf16.msra.mxu0 0
  %125 = vmatprep.subr.bf16.mxu0 0
  %126 = vmatpush1.bf16.msra.mxu0 0
  %127 = vmatprep.mubr.bf16.mxu0 0
  %128 = vmatmul.mubr.bf16.gmra.mrb[0].mxu0 %v23
  %v129 = vpop.f32.mrb[0].mxu0
  %v130 = vadd.f32 %v45, %v129
  %v131 = vpop.f32.mrb[0].mxu0
  %v132 = vpop.f32.mrb[0].mxu0
  %v133 = vadd.f32 %v45, %v132
  %v134 = vpop.f32.mrb[0].mxu0
  %135 = vdwg.mxu0
  %v136 = vmul.f32 %v130, 0.5
  %v137 = vmul.f32 %v133, 0.5
  %v138 = vmul.f32 %v130, 0.70710677
  %v139 = vmul.f32 %v133, 0.70710677
  %v140 = verf.f32.pop %v138
  %v141 = verf.f32.pop %v139
  %v142 = vadd.f32 %v140, 1.0
  %v143 = vadd.f32 %v141, 1.0
  %v144 = vmul.f32 %v136, %v142
  %v145 = vmul.f32 %v137, %v143
  %146 = vadd.xlane.f32.xlu0 %v144
  %v147 = vpop.xlane.xlu0 %146
  %148 = vadd.xlane.f32.xlu0 %v145
  %v149 = vpop.xlane.xlu0 %148
  %v150 = vmul.f32 %v144, %v144
  %v151 = vmul.f32 %v145, %v145
  %152 = vadd.xlane.f32.xlu0 %v150
  %v153 = vpop.xlane.xlu0 %152
  %154 = vadd.xlane.f32.xlu0 %v151
  %v155 = vpop.xlane.xlu0 %154
  %v156 = vmul.f32 %v147, 0.03125
  %v157 = vmul.f32 %v149, 0.03125
  %v158 = vmul.f32 %v153, 0.03125
  %v159 = vmul.f32 %v155, 0.03125
  %v160 = vmul.f32 %v156, %v156
  %v161 = vmul.f32 %v157, %v157
  %v162 = vsub.f32 %v158, %v160
  %v163 = vsub.f32 %v159, %v161
  %v164 = vmax.f32 %v162, 0.0
  %v165 = vmax.f32 %v163, 0.0
  %v166 = vsub.f32 %v144, %v156
  %v167 = vsub.f32 %v145, %v157
  %v168 = vadd.f32 %v164, 1e-12
  %v169 = vadd.f32 %v165, 1e-12
  %v170 = vrsqrt.pop %v168
  %v171 = vrsqrt.pop %v169
  %v172 = vmul.f32 %v166, %v170
  %v173 = vmul.f32 %v167, %v171
  %v174 = vpack.c.bf16 %v173, %v172
  %v175 = vld [vmem:[%s3] sm:$0xf]
  %v176 = vld [vmem:[%s3 + $0x4] sm:$0xf]
  %v177 = vld [vmem:[%s3 + $0x8] sm:$0xf]
  %v178 = vld [vmem:[%s3 + $0xc] sm:$0xf]
  %v179 = vld [vmem:[%s3 + $0x10] sm:$0xf]
  %v180 = vld [vmem:[%s3 + $0x14] sm:$0xf]
  %v181 = vld [vmem:[%s3 + $0x18] sm:$0xf]
  %v182 = vld [vmem:[%s3 + $0x1c] sm:$0xf]
  %v183 = vld [vmem:[%s3 + $0x20] sm:$0xf]
  %v184 = vld [vmem:[%s3 + $0x24] sm:$0xf]
  %v185 = vld [vmem:[%s3 + $0x28] sm:$0xf]
  %v186 = vld [vmem:[%s3 + $0x2c] sm:$0xf]
  %v187 = vld [vmem:[%s3 + $0x30] sm:$0xf]
  %v188 = vld [vmem:[%s3 + $0x34] sm:$0xf]
  %v189 = vld [vmem:[%s3 + $0x38] sm:$0xf]
  %v190 = vld [vmem:[%s3 + $0x3c] sm:$0xf]
  %v191 = vld [vmem:[%s4] sm:$0x1]
  %v193 = vlaneseq
  %v194 = vshrl.u32 %v193, 7
  %v195 = vsub.s32 0, %v194
  %v196 = vrot.slane %v191, %v195
  %v214 = vunpack.c.l.b16 %v175
  %v215 = vunpack.c.l.b16 %v176
  %v216 = vunpack.c.l.b16 %v177
  %v217 = vunpack.c.l.b16 %v178
  %v218 = vunpack.c.l.b16 %v179
  %v219 = vunpack.c.l.b16 %v180
  %v220 = vunpack.c.l.b16 %v181
  %v221 = vunpack.c.l.b16 %v182
  %v222 = vunpack.c.l.b16 %v183
  %v223 = vunpack.c.l.b16 %v184
  %v224 = vunpack.c.l.b16 %v185
  %v225 = vunpack.c.l.b16 %v186
  %v226 = vunpack.c.l.b16 %v187
  %v227 = vunpack.c.l.b16 %v188
  %v228 = vunpack.c.l.b16 %v189
  %v229 = vunpack.c.l.b16 %v190
  %v230 = vpack.c.b16 %v215, %v214
  %v231 = vpack.c.b16 %v217, %v216
  %v232 = vpack.c.b16 %v219, %v218
  %v233 = vpack.c.b16 %v221, %v220
  %v234 = vpack.c.b16 %v223, %v222
  %v235 = vpack.c.b16 %v225, %v224
  %v236 = vpack.c.b16 %v227, %v226
  %v237 = vpack.c.b16 %v229, %v228
  %246 = vmatprep.subr.bf16.mxu0 0
  %247 = vmatpush1.bf16.msra.mxu0 %v230
  %248 = vmatprep.subr.bf16.mxu0 0
  %249 = vmatpush1.bf16.msra.mxu0 %v231
  %250 = vmatprep.subr.bf16.mxu0 0
  %251 = vmatpush1.bf16.msra.mxu0 %v232
  %252 = vmatprep.subr.bf16.mxu0 0
  %253 = vmatpush1.bf16.msra.mxu0 %v233
  %254 = vmatprep.subr.bf16.mxu0 0
  %255 = vmatpush1.bf16.msra.mxu0 %v234
  %256 = vmatprep.subr.bf16.mxu0 0
  %257 = vmatpush1.bf16.msra.mxu0 %v235
  %258 = vmatprep.subr.bf16.mxu0 0
  %259 = vmatpush1.bf16.msra.mxu0 %v236
  %260 = vmatprep.subr.bf16.mxu0 0
  %261 = vmatpush1.bf16.msra.mxu0 %v237
  %262 = vmatprep.subr.bf16.mxu0 0
  %263 = vmatpush1.bf16.msra.mxu0 0
  %264 = vmatprep.subr.bf16.mxu0 0
  %265 = vmatpush1.bf16.msra.mxu0 0
  %266 = vmatprep.subr.bf16.mxu0 0
  %267 = vmatpush1.bf16.msra.mxu0 0
  %268 = vmatprep.subr.bf16.mxu0 0
  %269 = vmatpush1.bf16.msra.mxu0 0
  %270 = vmatprep.subr.bf16.mxu0 0
  %271 = vmatpush1.bf16.msra.mxu0 0
  %272 = vmatprep.subr.bf16.mxu0 0
  %273 = vmatpush1.bf16.msra.mxu0 0
  %274 = vmatprep.subr.bf16.mxu0 0
  %275 = vmatpush1.bf16.msra.mxu0 0
  %276 = vmatprep.subr.bf16.mxu0 0
  %277 = vmatpush1.bf16.msra.mxu0 0
  %278 = vmatprep.mubr.bf16.mxu0 0
  %279 = vmatmul.mubr.bf16.gmra.mrb[0].mxu0 %v174
  %v280 = vpop.f32.mrb[0].mxu0
  %v281 = vadd.f32 %v196, %v280
  %v282 = vpop.f32.mrb[0].mxu0
  %v283 = vpop.f32.mrb[0].mxu0
  %v284 = vadd.f32 %v196, %v283
  %v285 = vpop.f32.mrb[0].mxu0
  %286 = vdwg.mxu0
  %vm287 = vcmask 130048
  %288 = vst.msk [vmem:[%s5] sm:$0xff] %vm287, %v281
  %289 = vst.msk [vmem:[%s5 + $0x8] sm:$0xff] %vm287, %v284
  // Predicated region
  $region22: #{output_process_bert.1} parent=0 // pred_check
    _
  $region23: #{output_process_bert.1} parent=0 // pred_check_branch
    %291 = sbr.rel (0) target = $region25
  $region24: #{output_process_bert.1} parent=0 // pred_region
    _
  $region25: #{output_process_bert.1} parent=0 // pred_fallthru
    _
  // Predicated region
  $region26: #{output_process_bert.1} parent=0 // pred_check
    _
  $region27: #{output_process_bert.1} parent=0 // pred_check_branch
    %293 = sbr.rel (0) target = $region29
  $region28: #{output_process_bert.1} parent=0 // pred_region
    _
  $region29: #{output_process_bert.1} parent=0 // pred_fallthru
    _

</llo_original>
